<compile_context>
chip_gen: v5e
topology: v5e:2x2
jax: 0.10.0
libtpu: 0.0.40
codegen_flags: <defaults>
</compile_context>

<pallas_src>
import jax
import jax.numpy as jnp
from jax import lax
from jax.experimental import pallas as pl
from jax.experimental.pallas import tpu as pltpu


def _round_up(x, m):
    return ((x + m - 1) // m) * m


# ---------------- Kernel A: norm_i = rsqrt(rowsum_i(adj + I)) ----------------
def _norm_kernel(adj_ref, norm_ref, deg_ref):
    k = pl.program_id(1)

    @pl.when(k == 0)
    def _():
        deg_ref[...] = jnp.zeros_like(deg_ref)

    # Row-sum on the MXU (idle otherwise): int8 tile -> bf16, dot with a bf16
    # ones matrix, f32 accumulation (exact for 0/1/2 entries).
    a = adj_ref[...].astype(jnp.bfloat16)
    ones = jnp.ones((a.shape[1], 128), jnp.bfloat16)
    deg_ref[...] += jnp.dot(a, ones, preferred_element_type=jnp.float32)

    @pl.when(k == pl.num_programs(1) - 1)
    def _():
        # adj already has +I folded in, so rowsum == 1 + degree exactly; every
        # column of deg_ref holds the same value -> take column 0.
        norm_ref[...] = lax.rsqrt(deg_ref[:, 0:1])


# ----------- Kernel B: out_i = norm_i * ((A + I) @ (norm ⊙ x))_i -------------
def _gcn_kernel(adj_ref, x_ref, norm_k_ref, norm_i_ref, o_ref):
    k = pl.program_id(1)

    @pl.when(k == 0)
    def _():
        o_ref[...] = jnp.zeros_like(o_ref)

    # Scale source rows on the fly (f32 mult, one bf16 round) and run the
    # bf16 x bf16 -> f32 MXU matmul straight into the resident output block.
    xs = (norm_k_ref[...] * x_ref[...]).astype(jnp.bfloat16)
    o_ref[...] += jnp.dot(adj_ref[...].astype(jnp.bfloat16), xs,
                          preferred_element_type=jnp.float32)

    @pl.when(k == pl.num_programs(1) - 1)
    def _():
        o_ref[...] = norm_i_ref[...] * o_ref[...]


def pure_conv_gcn(x, adj, *, max_tile=1024):
    """PureConv(indim, indim, aggr='gcn').forward(x, adj) with dense adj."""
    N, D = x.shape
    assert adj.shape == (N, N)

    # ---- tile selection --------------------------------------------------
    Nr = _round_up(N, 128)
    tk = min(max_tile, Nr)          # contraction tile (lane dim of adj blocks)
    Np = _round_up(N, tk)           # padded N, multiple of tk (and of 128)
    nb_k = Np // tk

    # Row tile: largest 128-multiple dividing Np, capped so the parallel i
    # axis has >= 2 blocks when possible (v7x has 2 TensorCores).
    cap = min(max_tile, Np)
    if Np >= 256:
        cap = min(cap, Np // 2)
    tm = 128
    cand = (cap // 128) * 128
    while cand >= 128:
        if Np % cand == 0:
            tm = cand
            break
        cand -= 128
    nb_i = Np // tm

    # Kernel A is pure streaming -> give it a wider contraction tile.
    s = 1
    for c in range(min(nb_k, max(1, 2048 // tk)), 0, -1):
        if nb_k % c == 0:
            s = c
            break
    tka = tk * s
    nb_ka = Np // tka

    Dp = _round_up(D, 128)

    # ---- single XLA pass over adj: pad, fold +I on the diagonal, cast int8.
    adj_p = jnp.pad(adj.astype(jnp.float32), ((0, Np - N), (0, Np - N)))
    row_i = lax.broadcasted_iota(jnp.int32, (Np, Np), 0)
    col_i = lax.broadcasted_iota(jnp.int32, (Np, Np), 1)
    adj_conv = (adj_p + (row_i == col_i).astype(jnp.float32)).astype(jnp.int8)

    x_p = jnp.pad(x.astype(jnp.float32), ((0, Np - N), (0, Dp - D)))

    cparams = pltpu.CompilerParams(
        dimension_semantics=("parallel", "arbitrary"),
        vmem_limit_bytes=64 * 1024 * 1024,
    )

    # Kernel A: per-row norm.
    norm = pl.pallas_call(
        _norm_kernel,
        out_shape=jax.ShapeDtypeStruct((Np, 1), jnp.float32),
        grid_spec=pltpu.PrefetchScalarGridSpec(
            num_scalar_prefetch=0,
            grid=(nb_i, nb_ka),
            in_specs=[
                pl.BlockSpec((tm, tka), lambda i, k: (i, k)),   # adj+I (int8)
            ],
            out_specs=pl.BlockSpec((tm, 1), lambda i, k: (i, 0)),
            scratch_shapes=[pltpu.VMEM((tm, 128), jnp.float32)],  # degree acc
        ),
        compiler_params=cparams,
    )(adj_conv)

    # Kernel B: normalized aggregation.
    out = pl.pallas_call(
        _gcn_kernel,
        out_shape=jax.ShapeDtypeStruct((Np, Dp), jnp.float32),
        grid_spec=pltpu.PrefetchScalarGridSpec(
            num_scalar_prefetch=0,
            grid=(nb_i, nb_k),
            in_specs=[
                pl.BlockSpec((tm, tk), lambda i, k: (i, k)),    # adj+I (int8)
                pl.BlockSpec((tk, Dp), lambda i, k: (k, 0)),    # x source rows
                pl.BlockSpec((tk, 1), lambda i, k: (k, 0)),     # norm (source)
                pl.BlockSpec((tm, 1), lambda i, k: (i, 0)),     # norm (dest)
            ],
            out_specs=pl.BlockSpec((tm, Dp), lambda i, k: (i, 0)),
        ),
        compiler_params=cparams,
    )(adj_conv, x_p, norm, norm)

    return out[:N, :D].astype(x.dtype)


# --------------------------------- reference ---------------------------------
def pure_conv_gcn_ref(x, adj):
    norm = lax.rsqrt(1.0 + jnp.sum(adj, axis=-1)).reshape(-1, 1)
    xs = norm * x
    return norm * (adj @ xs + xs)


if __name__ == "__main__":
    N, D = 256, 64
    key = jax.random.PRNGKey(0)
    kx, ka = jax.random.split(key)

    x = jax.random.normal(kx, (N, D), dtype=jnp.float32)
    # Synthetic sparse-ish 0/1 adjacency, densified (spmm_add == dense matmul).
    adj = (jax.random.uniform(ka, (N, N)) < 0.05).astype(jnp.float32)

    out = jax.block_until_ready(pure_conv_gcn(x, adj))
    ref = pure_conv_gcn_ref(x, adj)

    assert out.shape == (N, D) and out.dtype == jnp.float32
    # bf16 matmul inputs (f32 accumulation) -> loose-ish tolerance vs f32 ref.
    assert jnp.allclose(out, ref, atol=2e-2, rtol=2e-2), \
        float(jnp.max(jnp.abs(out - ref)))
    print("KERNEL_OK")
</pallas_src>

<mosaic_0001>
module attributes {stable_mosaic.version = 11 : i64} {
  func.func @_norm_kernel(%arg0: i32, %arg1: i32, %arg2: memref<128x256xi8, #tpu.memory_space<vmem>>, %arg3: memref<128x1xf32, #tpu.memory_space<vmem>>, %arg4: memref<128x128xf32, #tpu.memory_space<vmem>>) attributes {dimension_semantics = [#tpu.dimension_semantics<parallel>, #tpu.dimension_semantics<arbitrary>], iteration_bounds = array<i64: 2, 1>, scalar_prefetch = 0 : i64, scratch_operands = 1 : i64, tpu.core_type = #tpu.core_type<tc>, window_params = [{transform_indices = @transform_0, window_bounds = array<i64: 128, 256>}, {transform_indices = @transform_1, window_bounds = array<i64: 128, 1>}]} {
    %c0_i32 = arith.constant 0 : i32
    %0 = arith.cmpi eq, %arg1, %c0_i32 : i32
    %1 = arith.extui %0 : i1 to i32
    %c0_i32_0 = arith.constant 0 : i32
    %2 = arith.cmpi ne, %1, %c0_i32_0 : i32
    scf.if %2 {
      %cst_9 = arith.constant 0.000000e+00 : f32
      %13 = vector.broadcast %cst_9 : f32 to vector<128x128xf32>
      %c0_10 = arith.constant 0 : index
      %c0_11 = arith.constant 0 : index
      %14 = vector.load %arg4[%c0_10, %c0_11] : memref<128x128xf32, #tpu.memory_space<vmem>>, vector<128x128xf32>
      tpu.vector_store %arg4[%c0_10, %c0_11], %13 {strides = array<i32>} : memref<128x128xf32, #tpu.memory_space<vmem>>, vector<128x128xf32>,
    } else {
    }
    %c0 = arith.constant 0 : index
    %c0_1 = arith.constant 0 : index
    %3 = vector.load %arg2[%c0, %c0_1] : memref<128x256xi8, #tpu.memory_space<vmem>>, vector<128x256xi8>
    %4 = arith.sitofp %3 : vector<128x256xi8> to vector<128x256xbf16>
    %cst = arith.constant 1.000000e+00 : bf16
    %5 = vector.broadcast %cst : bf16 to vector<256x128xbf16>
    %c0_2 = arith.constant 0 : index
    %c0_3 = arith.constant 0 : index
    %6 = vector.load %arg4[%c0_2, %c0_3] : memref<128x128xf32, #tpu.memory_space<vmem>>, vector<128x128xf32>
    %cst_4 = arith.constant dense<0.000000e+00> : vector<128x128xf32>
    %7 = tpu.matmul %4, %5, %cst_4 {dimension_numbers = #tpu.dot_dimension_numbers<[1], [0], [0], [1], [0, 0, 1, 1], [], []>} : vector<128x256xbf16>, vector<256x128xbf16>, vector<128x128xf32> -> vector<128x128xf32>
    %8 = arith.addf %6, %7 : vector<128x128xf32>
    %c0_5 = arith.constant 0 : index
    %c0_6 = arith.constant 0 : index
    %9 = vector.load %arg4[%c0_5, %c0_6] : memref<128x128xf32, #tpu.memory_space<vmem>>, vector<128x128xf32>
    tpu.vector_store %arg4[%c0_5, %c0_6], %8 {strides = array<i32>} : memref<128x128xf32, #tpu.memory_space<vmem>>, vector<128x128xf32>,
    %c0_i32_7 = arith.constant 0 : i32
    %10 = arith.cmpi eq, %arg1, %c0_i32_7 : i32
    %11 = arith.extui %10 : i1 to i32
    %c0_i32_8 = arith.constant 0 : i32
    %12 = arith.cmpi ne, %11, %c0_i32_8 : i32
    scf.if %12 {
      %c0_9 = arith.constant 0 : index
      %c0_10 = arith.constant 0 : index
      %13 = vector.load %arg4[%c0_9, %c0_10] : memref<128x128xf32, #tpu.memory_space<vmem>>, vector<128x1xf32>
      %14 = math.rsqrt %13 : vector<128x1xf32>
      %c0_11 = arith.constant 0 : index
      %c0_12 = arith.constant 0 : index
      %15 = vector.load %arg3[%c0_11, %c0_12] : memref<128x1xf32, #tpu.memory_space<vmem>>, vector<128x1xf32>
      tpu.vector_store %arg3[%c0_11, %c0_12], %14 {strides = array<i32>} : memref<128x1xf32, #tpu.memory_space<vmem>>, vector<128x1xf32>,
    } else {
    }
    return
  }
  func.func @transform_0(%arg0: i32, %arg1: i32) -> (i32, i32) {
    %c0_i32 = arith.constant 0 : i32
    return %arg0, %arg1 : i32, i32
  }
  func.func @transform_1(%arg0: i32, %arg1: i32) -> (i32, i32) {
    %c0_i32 = arith.constant 0 : i32
    %c0_i32_0 = arith.constant 0 : i32
    return %arg0, %c0_i32 : i32, i32
  }
}

</mosaic_0001>

<llo_original>
// kernel: tpu_custom_call.1
$region0: #{tpu_custom_call.1}
  #allocation0 [shape = 'u32[]', space=smem, size = 0x4, offset = 0x4, fixed_abs, tag = 'smem constant byte address 0x4 - core index']
  #allocation1 [shape = 'u32[72,128]{1,0:T(1,128)}', space=vmem, size = 0x9000, scoped, tag = 'internal scratch']
  #allocation2 [shape = 'f32[128,128]{1,0:T(8,128)}', space=vmem, size = 0x10000, scoped, tag = 'scratch operand']
  %s0 = inlined_call_operand.hbm [shape: s8[256,256], index: 0, kind: input, shape index: {}]
  %s1 = inlined_call_operand.vmem [shape: f32[256,1], index: 1, kind: output, shape index: {}]
  %s2 = sld [smem:[#allocation0]]
  $region49: #{tpu_custom_call.1} parent=0
    _
  %s4 = ssub.s32 1, %s2
  %s5 = scalar_select 0, %s4, %s2
  $region1: #{tpu_custom_call.1} parent=0
    #allocation3 [shape = 'u8[65536]{0}', space=vmem, size = 0x10000, scoped, tag = 'input window, operand 0']
    #allocation4 [shape = 's32[2]{0}', space=sflag, size = 0x8, scoped, tag = 'scoped memory for tpu_custom_call.1']
    %6 = vsyncpa [#allocation4], 0
    %s7 = scalar_lea.sflag [#allocation4], 1
    %8 = vsyncpa %s7, 0
    loop: start=0, step=1, limit=4
    $region2: #{tpu_custom_call.1} parent=1 // loop_pre_header
      _
    $region3: #{tpu_custom_call.1} parent=1 // loop_header
      %s10 = sphi 0, %s14
      %p11 = scmp.ge.s32.totalorder %s10, 4
      %s17 = sphi 0, %s29
      %s18 = sphi 0, %s25
      %s19 = sphi 0, %s17
      %s20 = sphi 0, %s18
      %s21 = sphi 0, %s19
      %s22 = sphi 0, %s20
      %s34 = sphi 0, %s36
      %s37 = sphi 0, %s34
      %s38 = sphi 0, %s37
      %s54 = sphi 0, %s38
      %s60 = sphi 0, %s62
      %s63 = sphi 0, %s60
      %s64 = sphi 0, %s63
      %s80 = sphi 0, %s64
    $region4: #{tpu_custom_call.1} parent=1 // loop_header_branch
      %13 = sbr.rel (%p11) target = $region8
    $region5: #{tpu_custom_call.1} parent=1 // loop_body
      %s15 = ssub.s32 %s10, 1
      %s16 = ssub.s32 %s10, 2
      %s23 = sadd.s32 1, %s18
      %p24 = scmp.ge.s32.totalorder %s23, 1
      %s25 = scalar_select %p24, 0, %s23
      %s26 = sadd.s32 1, %s17
      %s27 = scalar_select %p24, %s26, %s17
      %p28 = scmp.ge.s32.totalorder %s27, 2
      %s29 = scalar_select %p28, 0, %s27
      %s30 = ssub.s32 %s17, %s29
      %s31 = ssub.s32 %s18, %s25
      %s32 = sor.u32 %s30, %s31
      %p33 = scmp.eq.s32.totalorder %s32, 0
      %s35 = sadd.s32 %s34, 1
      %s36 = scalar_select %p33, %s34, %s35
      %p39 = pneg %p33
      %p40 = scmp.eq.s32.totalorder %s10, 1
      %p41 = por %p39, %p40
      %p42 = scmp.ne.s32.totalorder %s34, %s37
      %p43 = scmp.eq.s32.totalorder %s10, 0
      %p44 = por %p42, %p43
      %p45 = scmp.ne.s32.totalorder %s34, %s37
      %p46 = scmp.eq.s32.totalorder %s15, 1
      %p47 = por %p45, %p46
      %p48 = scmp.ne.s32.totalorder %s37, %s38
      %p49 = scmp.eq.s32.totalorder %s15, 0
      %p50 = por %p48, %p49
      %p51 = scmp.ne.s32.totalorder %s37, %s38
      %p52 = scmp.eq.s32.totalorder %s16, 1
      %p53 = por %p51, %p52
      %p55 = scmp.ne.s32.totalorder %s38, %s54
      %p56 = scmp.eq.s32.totalorder %s16, 0
      %p57 = por %p55, %p56
      %s58 = ssub.s32 %s17, %s29
      %p59 = scmp.eq.s32.totalorder %s58, 0
      %s61 = sadd.s32 %s60, 1
      %s62 = scalar_select %p59, %s60, %s61
      %p65 = pneg %p59
      %p66 = scmp.eq.s32.totalorder %s10, 1
      %p67 = por %p65, %p66
      %p68 = scmp.ne.s32.totalorder %s60, %s63
      %p69 = scmp.eq.s32.totalorder %s10, 0
      %p70 = por %p68, %p69
      %p71 = scmp.ne.s32.totalorder %s60, %s63
      %p72 = scmp.eq.s32.totalorder %s15, 1
      %p73 = por %p71, %p72
      %p74 = scmp.ne.s32.totalorder %s63, %s64
      %p75 = scmp.eq.s32.totalorder %s15, 0
      %p76 = por %p74, %p75
      %p77 = scmp.ne.s32.totalorder %s63, %s64
      %p78 = scmp.eq.s32.totalorder %s16, 1
      %p79 = por %p77, %p78
      %p81 = scmp.ne.s32.totalorder %s64, %s80
      %p82 = scmp.eq.s32.totalorder %s16, 0
      %p83 = por %p81, %p82
      %p84 = scmp.le.s32.totalorder 1, %s10
      %p85 = scmp.lt.s32.totalorder %s10, 3
      %p86 = pnand %p84, %p85
      %p87 = pneg %p86
      // Predicated region
      $region9: #{tpu_custom_call.1} parent=5 // pred_check
        _
      $region10: #{tpu_custom_call.1} parent=5 // pred_check_branch
        %89 = sbr.rel (%p86) target = $region12
      $region11: #{tpu_custom_call.1} parent=5 // pred_region
        %s90 = ssub.s32 %s10, 1
      $region12: #{tpu_custom_call.1} parent=5 // pred_fallthru
        _
      %p91 = scmp.lt.s32.totalorder %s10, 2
      // Predicated region
      $region13: #{tpu_custom_call.1} parent=5 // pred_check
        %p92 = pneg %p91
      $region14: #{tpu_custom_call.1} parent=5 // pred_check_branch
        %94 = sbr.rel (%p92) target = $region16
      $region15: #{tpu_custom_call.1} parent=5 // pred_region
        // Predicated region
        $region17: #{tpu_custom_call.1} parent=15 // pred_check
          %p95 = pneg %p44
        $region18: #{tpu_custom_call.1} parent=15 // pred_check_branch
          %97 = sbr.rel (%p95) target = $region20
        $region19: #{tpu_custom_call.1} parent=15 // pred_region
          %s98 = sand.u32 %s34, 1
          %s99 = scalar_lea.sflag [#allocation4], %s98
          %s100 = sand.u32 %s34, 1
          %s101 = smul.addr %s100, 64
          %s102 = scalar_lea.vmem [#allocation3], %s101
          %s103 = smul.u32 4, %s17
          %s104 = smul.u32 2, %s18
          %106 = vsyncadd %s99, 0
          %s107 = smul.addr %s103, 2
          %s108 = sadd.s32 %s104, %s107
          %s109 = smul.addr %s108, 8
          %s110 = scalar_lea.hbm %s0, %s109
          %s111 = sshll.u32 %s110, 4
          %s112 = int_to_ptr.hbm [resolvable:$true] %s111
          %s113 = sshll.u32 %s102, 4
          %s114 = int_to_ptr.vmem [resolvable:$true] %s113
          %119 = dma.hbm_to_vmem [thread:$0]  %s112, 1024, %s114, %s99, 256, 256, 16
        $region20: #{tpu_custom_call.1} parent=15 // pred_fallthru
          _
      $region16: #{tpu_custom_call.1} parent=5 // pred_fallthru
        _
      %p120 = scmp.le.s32.totalorder 1, %s10
      %p121 = scmp.lt.s32.totalorder %s10, 3
      %p122 = pnand %p120, %p121
      %p123 = pneg %p122
      // Predicated region
      $region21: #{tpu_custom_call.1} parent=5 // pred_check
        _
      $region22: #{tpu_custom_call.1} parent=5 // pred_check_branch
        %125 = sbr.rel (%p122) target = $region24
      $region23: #{tpu_custom_call.1} parent=5 // pred_region
        %s126 = ssub.s32 %s10, 1
        %s127 = sand.u32 %s37, 1
        %s128 = scalar_lea.sflag [#allocation4], %s127
        %s129 = sand.u32 %s37, 1
        %s130 = smul.addr %s129, 64
        %s131 = scalar_lea.vmem [#allocation3], %s130
        // Predicated region
        $region25: #{tpu_custom_call.1} parent=23 // pred_check
          %p132 = pneg %p50
        $region26: #{tpu_custom_call.1} parent=23 // pred_check_branch
          %134 = sbr.rel (%p132) target = $region28
        $region27: #{tpu_custom_call.1} parent=23 // pred_region
          %136 = dma.done %s128, 1024
        $region28: #{tpu_custom_call.1} parent=23 // pred_fallthru
          _
        %s137 = sand.u32 %s37, 1
        %s138 = scalar_lea.sflag [#allocation4], %s137
        %s139 = sand.u32 %s37, 1
        %s140 = smul.addr %s139, 64
        %s141 = scalar_lea.vmem [#allocation3], %s140
        %p142 = pneg %p50
        %p143 = pneg %p47
        %p144 = pneg %p76
        %p145 = pneg %p73
        %s146 = smul.u32 16, %s19
        %p147 = scmp.lt.s32.totalorder %s146, 31
        %s148 = scalar_select %p147, %s146, 31
        %s149 = smul.addr %s148, 8
        %s150 = scalar_lea.vmem %s1, %s149
        %s151 = smul.u32 4, %s19
        %s152 = smul.u32 2, %s20
        %s153 = smul.u32 16, %s19
        %p154 = scmp.lt.s32.totalorder %s153, 31
        %s155 = scalar_select %p154, %s153, 31
        %s156 = smul.addr %s155, 8
        %s157 = scalar_lea.vmem %s1, %s156
        %s158 = smul.u32 16, %s19
        %p160 = scmp.eq.s32.totalorder %s20, 0
        // Predicated region
        $region29: #{tpu_custom_call.1} parent=23 // pred_check
          %p161 = pneg %p160
        $region30: #{tpu_custom_call.1} parent=23 // pred_check_branch
          %163 = sbr.rel (%p161) target = $region32
        $region31: #{tpu_custom_call.1} parent=23 // pred_region
          %164 = vst [vmem:[#allocation2] sm:$0xff] 0.0
          %165 = vst [vmem:[#allocation2 + $0x8] sm:$0xff] 0.0
          %166 = vst [vmem:[#allocation2 + $0x10] sm:$0xff] 0.0
          %167 = vst [vmem:[#allocation2 + $0x18] sm:$0xff] 0.0
          %168 = vst [vmem:[#allocation2 + $0x20] sm:$0xff] 0.0
          %169 = vst [vmem:[#allocation2 + $0x28] sm:$0xff] 0.0
          %170 = vst [vmem:[#allocation2 + $0x30] sm:$0xff] 0.0
          %171 = vst [vmem:[#allocation2 + $0x38] sm:$0xff] 0.0
          %172 = vst [vmem:[#allocation2 + $0x40] sm:$0xff] 0.0
          %173 = vst [vmem:[#allocation2 + $0x48] sm:$0xff] 0.0
          %174 = vst [vmem:[#allocation2 + $0x50] sm:$0xff] 0.0
          %175 = vst [vmem:[#allocation2 + $0x58] sm:$0xff] 0.0
          %176 = vst [vmem:[#allocation2 + $0x60] sm:$0xff] 0.0
          %177 = vst [vmem:[#allocation2 + $0x68] sm:$0xff] 0.0
          %178 = vst [vmem:[#allocation2 + $0x70] sm:$0xff] 0.0
          %179 = vst [vmem:[#allocation2 + $0x78] sm:$0xff] 0.0
        $region32: #{tpu_custom_call.1} parent=23 // pred_fallthru
          _
        %v180 = vld [vmem:[%s131] sm:$0xff]
        %v181 = vld [vmem:[%s131 + $0x8] sm:$0xff]
        %v182 = vld [vmem:[%s131 + $0x10] sm:$0xff]
        %v183 = vld [vmem:[%s131 + $0x18] sm:$0xff]
        %v184 = vld [vmem:[%s131 + $0x20] sm:$0xff]
        %v185 = vld [vmem:[%s131 + $0x28] sm:$0xff]
        %v186 = vld [vmem:[%s131 + $0x30] sm:$0xff]
        %v187 = vld [vmem:[%s131 + $0x38] sm:$0xff]
        %v188 = vunpack.c.0.s8 %v180
        %v189 = vunpack.c.0.s8 %v181
        %v190 = vunpack.c.1.s8 %v180
        %v191 = vunpack.c.1.s8 %v181
        %v192 = vunpack.c.2.s8 %v180
        %v193 = vunpack.c.2.s8 %v181
        %v194 = vunpack.c.3.s8 %v180
        %v195 = vunpack.c.3.s8 %v181
        %v196 = vunpack.c.0.s8 %v182
        %v197 = vunpack.c.0.s8 %v183
        %v198 = vunpack.c.1.s8 %v182
        %v199 = vunpack.c.1.s8 %v183
        %v200 = vunpack.c.2.s8 %v182
        %v201 = vunpack.c.2.s8 %v183
        %v202 = vunpack.c.3.s8 %v182
        %v203 = vunpack.c.3.s8 %v183
        %v204 = vunpack.c.0.s8 %v184
        %v205 = vunpack.c.0.s8 %v185
        %v206 = vunpack.c.1.s8 %v184
        %v207 = vunpack.c.1.s8 %v185
        %v208 = vunpack.c.2.s8 %v184
        %v209 = vunpack.c.2.s8 %v185
        %v210 = vunpack.c.3.s8 %v184
        %v211 = vunpack.c.3.s8 %v185
        %v212 = vunpack.c.0.s8 %v186
        %v213 = vunpack.c.0.s8 %v187
        %v214 = vunpack.c.1.s8 %v186
        %v215 = vunpack.c.1.s8 %v187
        %v216 = vunpack.c.2.s8 %v186
        %v217 = vunpack.c.2.s8 %v187
        %v218 = vunpack.c.3.s8 %v186
        %v219 = vunpack.c.3.s8 %v187
        %v220 = vcvt.s32.f32 %v188
        %v221 = vcvt.s32.f32 %v189
        %v222 = vcvt.s32.f32 %v190
        %v223 = vcvt.s32.f32 %v191
        %v224 = vcvt.s32.f32 %v192
        %v225 = vcvt.s32.f32 %v193
        %v226 = vcvt.s32.f32 %v194
        %v227 = vcvt.s32.f32 %v195
        %v228 = vcvt.s32.f32 %v196
        %v229 = vcvt.s32.f32 %v197
        %v230 = vcvt.s32.f32 %v198
        %v231 = vcvt.s32.f32 %v199
        %v232 = vcvt.s32.f32 %v200
        %v233 = vcvt.s32.f32 %v201
        %v234 = vcvt.s32.f32 %v202
        %v235 = vcvt.s32.f32 %v203
        %v236 = vcvt.s32.f32 %v204
        %v237 = vcvt.s32.f32 %v205
        %v238 = vcvt.s32.f32 %v206
        %v239 = vcvt.s32.f32 %v207
        %v240 = vcvt.s32.f32 %v208
        %v241 = vcvt.s32.f32 %v209
        %v242 = vcvt.s32.f32 %v210
        %v243 = vcvt.s32.f32 %v211
        %v244 = vcvt.s32.f32 %v212
        %v245 = vcvt.s32.f32 %v213
        %v246 = vcvt.s32.f32 %v214
        %v247 = vcvt.s32.f32 %v215
        %v248 = vcvt.s32.f32 %v216
        %v249 = vcvt.s32.f32 %v217
        %v250 = vcvt.s32.f32 %v218
        %v251 = vcvt.s32.f32 %v219
        %v252 = vpack.c.bf16 %v222, %v220
        %v253 = vpack.c.bf16 %v223, %v221
        %v254 = vpack.c.bf16 %v226, %v224
        %v255 = vpack.c.bf16 %v227, %v225
        %v256 = vpack.c.bf16 %v230, %v228
        %v257 = vpack.c.bf16 %v231, %v229
        %v258 = vpack.c.bf16 %v234, %v232
        %v259 = vpack.c.bf16 %v235, %v233
        %v260 = vpack.c.bf16 %v238, %v236
        %v261 = vpack.c.bf16 %v239, %v237
        %v262 = vpack.c.bf16 %v242, %v240
        %v263 = vpack.c.bf16 %v243, %v241
        %v264 = vpack.c.bf16 %v246, %v244
        %v265 = vpack.c.bf16 %v247, %v245
        %v266 = vpack.c.bf16 %v250, %v248
        %v267 = vpack.c.bf16 %v251, %v249
        %v268 = vld [vmem:[#allocation2] sm:$0xff]
        %v269 = vld [vmem:[#allocation2 + $0x8] sm:$0xff]
        %v270 = vld [vmem:[#allocation2 + $0x10] sm:$0xff]
        %v271 = vld [vmem:[#allocation2 + $0x18] sm:$0xff]
        %v272 = vld [vmem:[#allocation2 + $0x20] sm:$0xff]
        %v273 = vld [vmem:[#allocation2 + $0x28] sm:$0xff]
        %v274 = vld [vmem:[#allocation2 + $0x30] sm:$0xff]
        %v275 = vld [vmem:[#allocation2 + $0x38] sm:$0xff]
        %v276 = vld [vmem:[#allocation2 + $0x40] sm:$0xff]
        %v277 = vld [vmem:[#allocation2 + $0x48] sm:$0xff]
        %v278 = vld [vmem:[#allocation2 + $0x50] sm:$0xff]
        %v279 = vld [vmem:[#allocation2 + $0x58] sm:$0xff]
        %v280 = vld [vmem:[#allocation2 + $0x60] sm:$0xff]
        %v281 = vld [vmem:[#allocation2 + $0x68] sm:$0xff]
        %v282 = vld [vmem:[#allocation2 + $0x70] sm:$0xff]
        %v283 = vld [vmem:[#allocation2 + $0x78] sm:$0xff]
        %284 = vmatpush.bf16.msra.mxu0 1065369472
        %285 = vmatpush.bf16.msra.mxu0 1065369472
        %286 = vmatpush.bf16.msra.mxu0 1065369472
        %287 = vmatpush.bf16.msra.mxu0 1065369472
        %288 = vmatpush.bf16.msra.mxu0 1065369472
        %289 = vmatpush.bf16.msra.mxu0 1065369472
        %290 = vmatpush.bf16.msra.mxu0 1065369472
        %291 = vmatpush.bf16.msra.mxu0 1065369472
        %292 = vmatmul.bf16.gmra.mxu0 %v252
        %v293 = vpop.f32.mrf.mxu0
        %v294 = vadd.f32 0.0, %v293
        %v295 = vpop.f32.mrf.mxu0
        %v296 = vadd.f32 0.0, %v295
        %297 = vmatmul.bf16.gmra.mxu0 %v254
        %v298 = vpop.f32.mrf.mxu0
        %v299 = vadd.f32 0.0, %v298
        %v300 = vpop.f32.mrf.mxu0
        %v301 = vadd.f32 0.0, %v300
        %302 = vmatmul.bf16.gmra.mxu0 %v256
        %v303 = vpop.f32.mrf.mxu0
        %v304 = vadd.f32 0.0, %v303
        %v305 = vpop.f32.mrf.mxu0
        %v306 = vadd.f32 0.0, %v305
        %307 = vmatmul.bf16.gmra.mxu0 %v258
        %v308 = vpop.f32.mrf.mxu0
        %v309 = vadd.f32 0.0, %v308
        %v310 = vpop.f32.mrf.mxu0
        %v311 = vadd.f32 0.0, %v310
        %312 = vmatmul.bf16.gmra.mxu0 %v260
        %v313 = vpop.f32.mrf.mxu0
        %v314 = vadd.f32 0.0, %v313
        %v315 = vpop.f32.mrf.mxu0
        %v316 = vadd.f32 0.0, %v315
        %317 = vmatmul.bf16.gmra.mxu0 %v262
        %v318 = vpop.f32.mrf.mxu0
        %v319 = vadd.f32 0.0, %v318
        %v320 = vpop.f32.mrf.mxu0
        %v321 = vadd.f32 0.0, %v320
        %322 = vmatmul.bf16.gmra.mxu0 %v264
        %v323 = vpop.f32.mrf.mxu0
        %v324 = vadd.f32 0.0, %v323
        %v325 = vpop.f32.mrf.mxu0
        %v326 = vadd.f32 0.0, %v325
        %327 = vmatmul.bf16.gmra.mxu0 %v266
        %v328 = vpop.f32.mrf.mxu0
        %v329 = vadd.f32 0.0, %v328
        %v330 = vpop.f32.mrf.mxu0
        %v331 = vadd.f32 0.0, %v330
        %332 = vdwg.mxu0
        %333 = vmatpush.bf16.msra.mxu0 1065369472
        %334 = vmatpush.bf16.msra.mxu0 1065369472
        %335 = vmatpush.bf16.msra.mxu0 1065369472
        %336 = vmatpush.bf16.msra.mxu0 1065369472
        %337 = vmatpush.bf16.msra.mxu0 1065369472
        %338 = vmatpush.bf16.msra.mxu0 1065369472
        %339 = vmatpush.bf16.msra.mxu0 1065369472
        %340 = vmatpush.bf16.msra.mxu0 1065369472
        %341 = vmatmul.bf16.gmra.mxu0 %v253
        %v342 = vpop.f32.mrf.mxu0
        %v343 = vadd.f32 %v294, %v342
        %v344 = vpop.f32.mrf.mxu0
        %v345 = vadd.f32 %v296, %v344
        %346 = vmatmul.bf16.gmra.mxu0 %v255
        %v347 = vpop.f32.mrf.mxu0
        %v348 = vadd.f32 %v299, %v347
        %v349 = vpop.f32.mrf.mxu0
        %v350 = vadd.f32 %v301, %v349
        %351 = vmatmul.bf16.gmra.mxu0 %v257
        %v352 = vpop.f32.mrf.mxu0
        %v353 = vadd.f32 %v304, %v352
        %v354 = vpop.f32.mrf.mxu0
        %v355 = vadd.f32 %v306, %v354
        %356 = vmatmul.bf16.gmra.mxu0 %v259
        %v357 = vpop.f32.mrf.mxu0
        %v358 = vadd.f32 %v309, %v357
        %v359 = vpop.f32.mrf.mxu0
        %v360 = vadd.f32 %v311, %v359
        %361 = vmatmul.bf16.gmra.mxu0 %v261
        %v362 = vpop.f32.mrf.mxu0
        %v363 = vadd.f32 %v314, %v362
        %v364 = vpop.f32.mrf.mxu0
        %v365 = vadd.f32 %v316, %v364
        %366 = vmatmul.bf16.gmra.mxu0 %v263
        %v367 = vpop.f32.mrf.mxu0
        %v368 = vadd.f32 %v319, %v367
        %v369 = vpop.f32.mrf.mxu0
        %v370 = vadd.f32 %v321, %v369
        %371 = vmatmul.bf16.gmra.mxu0 %v265
        %v372 = vpop.f32.mrf.mxu0
        %v373 = vadd.f32 %v324, %v372
        %v374 = vpop.f32.mrf.mxu0
        %v375 = vadd.f32 %v326, %v374
        %376 = vmatmul.bf16.gmra.mxu0 %v267
        %v377 = vpop.f32.mrf.mxu0
        %v378 = vadd.f32 %v329, %v377
        %v379 = vpop.f32.mrf.mxu0
        %v380 = vadd.f32 %v331, %v379
        %381 = vdwg.mxu0
        %v382 = vadd.f32 %v268, %v343
        %v383 = vadd.f32 %v269, %v345
        %v384 = vadd.f32 %v270, %v348
        %v385 = vadd.f32 %v271, %v350
        %v386 = vadd.f32 %v272, %v353
        %v387 = vadd.f32 %v273, %v355
        %v388 = vadd.f32 %v274, %v358
        %v389 = vadd.f32 %v275, %v360
        %v390 = vadd.f32 %v276, %v363
        %v391 = vadd.f32 %v277, %v365
        %v392 = vadd.f32 %v278, %v368
        %v393 = vadd.f32 %v279, %v370
        %v394 = vadd.f32 %v280, %v373
        %v395 = vadd.f32 %v281, %v375
        %v396 = vadd.f32 %v282, %v378
        %v397 = vadd.f32 %v283, %v380
        %398 = vst [vmem:[#allocation2] sm:$0xff] %v382
        %399 = vst [vmem:[#allocation2 + $0x8] sm:$0xff] %v383
        %400 = vst [vmem:[#allocation2 + $0x10] sm:$0xff] %v384
        %401 = vst [vmem:[#allocation2 + $0x18] sm:$0xff] %v385
        %402 = vst [vmem:[#allocation2 + $0x20] sm:$0xff] %v386
        %403 = vst [vmem:[#allocation2 + $0x28] sm:$0xff] %v387
        %404 = vst [vmem:[#allocation2 + $0x30] sm:$0xff] %v388
        %405 = vst [vmem:[#allocation2 + $0x38] sm:$0xff] %v389
        %406 = vst [vmem:[#allocation2 + $0x40] sm:$0xff] %v390
        %407 = vst [vmem:[#allocation2 + $0x48] sm:$0xff] %v391
        %408 = vst [vmem:[#allocation2 + $0x50] sm:$0xff] %v392
        %409 = vst [vmem:[#allocation2 + $0x58] sm:$0xff] %v393
        %410 = vst [vmem:[#allocation2 + $0x60] sm:$0xff] %v394
        %411 = vst [vmem:[#allocation2 + $0x68] sm:$0xff] %v395
        %412 = vst [vmem:[#allocation2 + $0x70] sm:$0xff] %v396
        %413 = vst [vmem:[#allocation2 + $0x78] sm:$0xff] %v397
        // Predicated region
        $region33: #{tpu_custom_call.1} parent=23 // pred_check
          %p414 = pneg %p160
        $region34: #{tpu_custom_call.1} parent=23 // pred_check_branch
          %416 = sbr.rel (%p414) target = $region36
        $region35: #{tpu_custom_call.1} parent=23 // pred_region
          %v417 = vld [vmem:[#allocation2] sm:$0xff]
          %v418 = vld [vmem:[#allocation2 + $0x8] sm:$0xff]
          %v419 = vld [vmem:[#allocation2 + $0x10] sm:$0xff]
          %v420 = vld [vmem:[#allocation2 + $0x18] sm:$0xff]
          %v421 = vld [vmem:[#allocation2 + $0x20] sm:$0xff]
          %v422 = vld [vmem:[#allocation2 + $0x28] sm:$0xff]
          %v423 = vld [vmem:[#allocation2 + $0x30] sm:$0xff]
          %v424 = vld [vmem:[#allocation2 + $0x38] sm:$0xff]
          %v425 = vld [vmem:[#allocation2 + $0x40] sm:$0xff]
          %v426 = vld [vmem:[#allocation2 + $0x48] sm:$0xff]
          %v427 = vld [vmem:[#allocation2 + $0x50] sm:$0xff]
          %v428 = vld [vmem:[#allocation2 + $0x58] sm:$0xff]
          %v429 = vld [vmem:[#allocation2 + $0x60] sm:$0xff]
          %v430 = vld [vmem:[#allocation2 + $0x68] sm:$0xff]
          %v431 = vld [vmem:[#allocation2 + $0x70] sm:$0xff]
          %v432 = vld [vmem:[#allocation2 + $0x78] sm:$0xff]
          %v433 = vrsqrt.pop %v417
          %v434 = vmul.f32 %v433, %v417
          %v435 = vmul.f32 %v434, %v433
          %v436 = vmul.f32 0.5, %v435
          %v437 = vsub.f32 1.5, %v436
          %v438 = vmul.f32 %v433, %v437
          %vm439 = vweird.f32 %v417
          %vm440 = vweird.f32 %v433
          %vm441 = vmor %vm439, %vm440
          %v442 = vsel %vm441, %v433, %v438
          %v443 = vrsqrt.pop %v418
          %v444 = vmul.f32 %v443, %v418
          %v445 = vmul.f32 %v444, %v443
          %v446 = vmul.f32 0.5, %v445
          %v447 = vsub.f32 1.5, %v446
          %v448 = vmul.f32 %v443, %v447
          %vm449 = vweird.f32 %v418
          %vm450 = vweird.f32 %v443
          %vm451 = vmor %vm449, %vm450
          %v452 = vsel %vm451, %v443, %v448
          %v453 = vrsqrt.pop %v419
          %v454 = vmul.f32 %v453, %v419
          %v455 = vmul.f32 %v454, %v453
          %v456 = vmul.f32 0.5, %v455
          %v457 = vsub.f32 1.5, %v456
          %v458 = vmul.f32 %v453, %v457
          %vm459 = vweird.f32 %v419
          %vm460 = vweird.f32 %v453
          %vm461 = vmor %vm459, %vm460
          %v462 = vsel %vm461, %v453, %v458
          %v463 = vrsqrt.pop %v420
          %v464 = vmul.f32 %v463, %v420
          %v465 = vmul.f32 %v464, %v463
          %v466 = vmul.f32 0.5, %v465
          %v467 = vsub.f32 1.5, %v466
          %v468 = vmul.f32 %v463, %v467
          %vm469 = vweird.f32 %v420
          %vm470 = vweird.f32 %v463
          %vm471 = vmor %vm469, %vm470
          %v472 = vsel %vm471, %v463, %v468
          %v473 = vrsqrt.pop %v421
          %v474 = vmul.f32 %v473, %v421
          %v475 = vmul.f32 %v474, %v473
          %v476 = vmul.f32 0.5, %v475
          %v477 = vsub.f32 1.5, %v476
          %v478 = vmul.f32 %v473, %v477
          %vm479 = vweird.f32 %v421
          %vm480 = vweird.f32 %v473
          %vm481 = vmor %vm479, %vm480
          %v482 = vsel %vm481, %v473, %v478
          %v483 = vrsqrt.pop %v422
          %v484 = vmul.f32 %v483, %v422
          %v485 = vmul.f32 %v484, %v483
          %v486 = vmul.f32 0.5, %v485
          %v487 = vsub.f32 1.5, %v486
          %v488 = vmul.f32 %v483, %v487
          %vm489 = vweird.f32 %v422
          %vm490 = vweird.f32 %v483
          %vm491 = vmor %vm489, %vm490
          %v492 = vsel %vm491, %v483, %v488
          %v493 = vrsqrt.pop %v423
          %v494 = vmul.f32 %v493, %v423
          %v495 = vmul.f32 %v494, %v493
          %v496 = vmul.f32 0.5, %v495
          %v497 = vsub.f32 1.5, %v496
          %v498 = vmul.f32 %v493, %v497
          %vm499 = vweird.f32 %v423
          %vm500 = vweird.f32 %v493
          %vm501 = vmor %vm499, %vm500
          %v502 = vsel %vm501, %v493, %v498
          %v503 = vrsqrt.pop %v424
          %v504 = vmul.f32 %v503, %v424
          %v505 = vmul.f32 %v504, %v503
          %v506 = vmul.f32 0.5, %v505
          %v507 = vsub.f32 1.5, %v506
          %v508 = vmul.f32 %v503, %v507
          %vm509 = vweird.f32 %v424
          %vm510 = vweird.f32 %v503
          %vm511 = vmor %vm509, %vm510
          %v512 = vsel %vm511, %v503, %v508
          %v513 = vrsqrt.pop %v425
          %v514 = vmul.f32 %v513, %v425
          %v515 = vmul.f32 %v514, %v513
          %v516 = vmul.f32 0.5, %v515
          %v517 = vsub.f32 1.5, %v516
          %v518 = vmul.f32 %v513, %v517
          %vm519 = vweird.f32 %v425
          %vm520 = vweird.f32 %v513
          %vm521 = vmor %vm519, %vm520
          %v522 = vsel %vm521, %v513, %v518
          %v523 = vrsqrt.pop %v426
          %v524 = vmul.f32 %v523, %v426
          %v525 = vmul.f32 %v524, %v523
          %v526 = vmul.f32 0.5, %v525
          %v527 = vsub.f32 1.5, %v526
          %v528 = vmul.f32 %v523, %v527
          %vm529 = vweird.f32 %v426
          %vm530 = vweird.f32 %v523
          %vm531 = vmor %vm529, %vm530
          %v532 = vsel %vm531, %v523, %v528
          %v533 = vrsqrt.pop %v427
          %v534 = vmul.f32 %v533, %v427
          %v535 = vmul.f32 %v534, %v533
          %v536 = vmul.f32 0.5, %v535
          %v537 = vsub.f32 1.5, %v536
          %v538 = vmul.f32 %v533, %v537
          %vm539 = vweird.f32 %v427
          %vm540 = vweird.f32 %v533
          %vm541 = vmor %vm539, %vm540
          %v542 = vsel %vm541, %v533, %v538
          %v543 = vrsqrt.pop %v428
          %v544 = vmul.f32 %v543, %v428
          %v545 = vmul.f32 %v544, %v543
          %v546 = vmul.f32 0.5, %v545
          %v547 = vsub.f32 1.5, %v546
          %v548 = vmul.f32 %v543, %v547
          %vm549 = vweird.f32 %v428
          %vm550 = vweird.f32 %v543
          %vm551 = vmor %vm549, %vm550
          %v552 = vsel %vm551, %v543, %v548
          %v553 = vrsqrt.pop %v429
          %v554 = vmul.f32 %v553, %v429
          %v555 = vmul.f32 %v554, %v553
          %v556 = vmul.f32 0.5, %v555
          %v557 = vsub.f32 1.5, %v556
          %v558 = vmul.f32 %v553, %v557
          %vm559 = vweird.f32 %v429
          %vm560 = vweird.f32 %v553
          %vm561 = vmor %vm559, %vm560
          %v562 = vsel %vm561, %v553, %v558
          %v563 = vrsqrt.pop %v430
          %v564 = vmul.f32 %v563, %v430
          %v565 = vmul.f32 %v564, %v563
          %v566 = vmul.f32 0.5, %v565
          %v567 = vsub.f32 1.5, %v566
          %v568 = vmul.f32 %v563, %v567
          %vm569 = vweird.f32 %v430
          %vm570 = vweird.f32 %v563
          %vm571 = vmor %vm569, %vm570
          %v572 = vsel %vm571, %v563, %v568
          %v573 = vrsqrt.pop %v431
          %v574 = vmul.f32 %v573, %v431
          %v575 = vmul.f32 %v574, %v573
          %v576 = vmul.f32 0.5, %v575
          %v577 = vsub.f32 1.5, %v576
          %v578 = vmul.f32 %v573, %v577
          %vm579 = vweird.f32 %v431
          %vm580 = vweird.f32 %v573
          %vm581 = vmor %vm579, %vm580
          %v582 = vsel %vm581, %v573, %v578
          %v583 = vrsqrt.pop %v432
          %v584 = vmul.f32 %v583, %v432
          %v585 = vmul.f32 %v584, %v583
          %v586 = vmul.f32 0.5, %v585
          %v587 = vsub.f32 1.5, %v586
          %v588 = vmul.f32 %v583, %v587
          %vm589 = vweird.f32 %v432
          %vm590 = vweird.f32 %v583
          %vm591 = vmor %vm589, %vm590
          %v592 = vsel %vm591, %v583, %v588
          %vm593 = vcmask 7168
          %594 = vst.msk [vmem:[%s157] sm:$0xff] %vm593, %v442
          %595 = vst.msk [vmem:[%s157 + $0x8] sm:$0xff] %vm593, %v452
          %596 = vst.msk [vmem:[%s157 + $0x10] sm:$0xff] %vm593, %v462
          %597 = vst.msk [vmem:[%s157 + $0x18] sm:$0xff] %vm593, %v472
          %598 = vst.msk [vmem:[%s157 + $0x20] sm:$0xff] %vm593, %v482
          %599 = vst.msk [vmem:[%s157 + $0x28] sm:$0xff] %vm593, %v492
          %600 = vst.msk [vmem:[%s157 + $0x30] sm:$0xff] %vm593, %v502
          %601 = vst.msk [vmem:[%s157 + $0x38] sm:$0xff] %vm593, %v512
          %602 = vst.msk [vmem:[%s157 + $0x40] sm:$0xff] %vm593, %v522
          %603 = vst.msk [vmem:[%s157 + $0x48] sm:$0xff] %vm593, %v532
          %604 = vst.msk [vmem:[%s157 + $0x50] sm:$0xff] %vm593, %v542
          %605 = vst.msk [vmem:[%s157 + $0x58] sm:$0xff] %vm593, %v552
          %606 = vst.msk [vmem:[%s157 + $0x60] sm:$0xff] %vm593, %v562
          %607 = vst.msk [vmem:[%s157 + $0x68] sm:$0xff] %vm593, %v572
          %608 = vst.msk [vmem:[%s157 + $0x70] sm:$0xff] %vm593, %v582
          %609 = vst.msk [vmem:[%s157 + $0x78] sm:$0xff] %vm593, %v592
        $region36: #{tpu_custom_call.1} parent=23 // pred_fallthru
          _
        %s610 = smul.u32 16, %s19
        %p611 = scmp.lt.s32.totalorder %s610, 31
        %s612 = scalar_select %p611, %s610, 31
        %s613 = smul.addr %s612, 8
        %s614 = scalar_lea.vmem %s1, %s613
        // Predicated region
        $region37: #{tpu_custom_call.1} parent=23 // pred_check
          %p615 = pneg %p73
        $region38: #{tpu_custom_call.1} parent=23 // pred_check_branch
          %617 = sbr.rel (%p615) target = $region40
        $region39: #{tpu_custom_call.1} parent=23 // pred_region
          %s618 = smul.u32 16, %s19
        $region40: #{tpu_custom_call.1} parent=23 // pred_fallthru
          _
      $region24: #{tpu_custom_call.1} parent=5 // pred_fallthru
        _
      %p619 = scmp.le.s32.totalorder 2, %s10
      // Predicated region
      $region41: #{tpu_custom_call.1} parent=5 // pred_check
        %p620 = pneg %p619
      $region42: #{tpu_custom_call.1} parent=5 // pred_check_branch
        %622 = sbr.rel (%p620) target = $region44
      $region43: #{tpu_custom_call.1} parent=5 // pred_region
        %s623 = ssub.s32 %s10, 2
        // Predicated region
        $region45: #{tpu_custom_call.1} parent=43 // pred_check
          %p624 = pneg %p79
        $region46: #{tpu_custom_call.1} parent=43 // pred_check_branch
          %626 = sbr.rel (%p624) target = $region48
        $region47: #{tpu_custom_call.1} parent=43 // pred_region
          %s627 = smul.u32 16, %s21
          %p628 = scmp.lt.s32.totalorder %s627, 31
          %s629 = scalar_select %p628, %s627, 31
          %s630 = smul.addr %s629, 8
          %s631 = scalar_lea.vmem %s1, %s630
        $region48: #{tpu_custom_call.1} parent=43 // pred_fallthru
          _
      $region44: #{tpu_custom_call.1} parent=5 // pred_fallthru
        _
    $region6: #{tpu_custom_call.1} parent=1 // loop_footer
      %s14 = sadd.s32 1, %s10
    $region7: #{tpu_custom_call.1} parent=1 // loop_footer_branch
      %9 = sbr.rel target = $region3
    $region8: #{tpu_custom_call.1} parent=1 // loop_exit
      _
    %632 = vsyncpa [#allocation4], 1
    %s633 = scalar_lea.sflag [#allocation4], 1
    %634 = vsyncpa %s633, 1

</llo_original>
